<compile_context>
chip_gen: v7x
topology: tpu7x:2x2x1
jax: 0.10.0
libtpu: 0.0.40
codegen_flags: <defaults>
</compile_context>

<pallas_src>
import jax
import jax.numpy as jnp
from jax.experimental import pallas as pl
from jax.experimental.pallas import tpu as pltpu


def _round_up(v, m):
    return ((v + m - 1) // m) * m


def _resnet_back_kernel(x_ref, w_ref, b_ref, o_ref):
    # x_ref: (tb, C, HW)  native NCHW block — C on sublanes, HW on lanes.
    # w_ref: (C, N_pad)   fc weight, transposed, pre-scaled by 1/HW, zero-padded.
    # b_ref: (1, N_pad)   fc bias, zero-padded.
    # o_ref: (tb, N_pad)
    # Adaptive-avg-pool: reduce the spatial (lane) axis, accumulating in f32.
    pooled = jnp.sum(x_ref[...].astype(jnp.float32), axis=-1)               # (tb, C)
    # Linear layer (1/HW already folded into w_ref), f32 MXU accumulation.
    out = jnp.dot(pooled, w_ref[...], preferred_element_type=jnp.float32)   # (tb, N_pad)
    o_ref[...] = (out + b_ref[...]).astype(o_ref.dtype)


def resnet_back_forward(x, weight, bias, *, batch_tile=None):
    """x: (B, C, H, W) NCHW.  weight: (num_classes, in_feat) like nn.Linear.
    bias: (num_classes,).  Returns (B, num_classes) (or (num_classes,) if B == 1,
    matching torch.squeeze)."""
    B, C, H, W = x.shape
    num_classes, in_feat = weight.shape
    assert in_feat == C, "channel dim must match fc in_features"
    HW = H * W

    # Free (bitcast) reshape — no data movement, activations stay NCHW in HBM.
    x3 = x.reshape(B, C, HW)

    # Lane-dense padded output width (>= 128, multiple of 128).
    n_pad = max(128, _round_up(num_classes, 128))
    # Fold the mean's 1/HW into the weight (one-time, trace-time).
    w_t = jnp.zeros((C, n_pad), dtype=jnp.float32).at[:, :num_classes].set(
        weight.astype(jnp.float32).T / HW)
    b2 = jnp.zeros((1, n_pad), dtype=jnp.float32).at[:, :num_classes].set(
        bias.astype(jnp.float32))

    # Batch tile: ~32 rows (~4 MiB f32 activations at C=512, HW=64) per grid step,
    # >= 2 grid steps when B allows (dual-TC v7x), multiples of 8 so output blocks
    # stay sublane-aligned.  B % tb != 0 is handled by Pallas boundary masking —
    # no padded copy of x in HBM.
    if batch_tile is None:
        if B <= 8:
            batch_tile = B
        elif B <= 64:
            batch_tile = max(8, ((B + 15) // 16) * 8)   # ≈ B/2, multiple of 8
        else:
            batch_tile = 32
    tb = batch_tile
    grid = (pl.cdiv(B, tb),)

    # VMEM budget: double-buffered lane-padded x block + resident weight/bias +
    # intermediates.  Explicit limit so large tiles work on v5e's 16 MiB default
    # scoped VMEM while leaving headroom under v7x's 64 MiB physical.
    hw_pad = _round_up(HW, 128)
    x_block_bytes = tb * C * hw_pad * x.dtype.itemsize
    vmem_limit = int(min(48 << 20, max(32 << 20, 2 * x_block_bytes + (16 << 20))))

    out = pl.pallas_call(
        _resnet_back_kernel,
        out_shape=jax.ShapeDtypeStruct((B, n_pad), x.dtype),
        grid_spec=pltpu.PrefetchScalarGridSpec(
            num_scalar_prefetch=0,
            grid=grid,
            in_specs=[
                # Activations, tiled on batch only; last two dims are full extents.
                pl.BlockSpec((tb, C, HW), lambda i: (i, 0, 0)),
                # Weight/bias are grid-invariant (constant index_map), so Pallas only
                # DMAs them once.  (Could be single-buffered via pl.Buffered(1) when
                # pushing batch_tile to the VMEM ceiling; at ~256 KiB it is left as-is.)
                pl.BlockSpec((C, n_pad), lambda i: (0, 0)),
                pl.BlockSpec((1, n_pad), lambda i: (0, 0)),
            ],
            out_specs=pl.BlockSpec((tb, n_pad), lambda i: (i, 0)),
        ),
        compiler_params=pltpu.CompilerParams(
            dimension_semantics=("parallel",),   # shard batch tiles across TCs / megacore
            vmem_limit_bytes=vmem_limit,
        ),
    )(x3, w_t, b2)

    logits = out[:, :num_classes]
    # torch.squeeze semantics: a batch of 1 collapses to a 1-D output.
    return logits[0] if B == 1 else logits


if __name__ == "__main__":
    # config='18' => in_feat = 512, num_classes = 10
    B, C, H, W = 2, 512, 8, 8
    num_classes = 10

    key = jax.random.PRNGKey(0)
    kx, kw, kb = jax.random.split(key, 3)

    x = jax.random.normal(kx, (B, C, H, W), dtype=jnp.float32)
    # nn.Linear-style init (uniform in [-1/sqrt(in_feat), 1/sqrt(in_feat)])
    bound = 1.0 / jnp.sqrt(jnp.float32(C))
    weight = jax.random.uniform(kw, (num_classes, C), jnp.float32, -bound, bound)
    bias = jax.random.uniform(kb, (num_classes,), jnp.float32, -bound, bound)

    out = resnet_back_forward(x, weight, bias)
    out = jax.block_until_ready(out)

    # Pure-JAX reference (pool -> squeeze -> fc)
    ref = jnp.mean(x, axis=(2, 3)) @ weight.T + bias
    assert out.shape == (B, num_classes)
    assert jnp.allclose(out, ref, atol=1e-4, rtol=1e-4)

    print("KERNEL_OK")
</pallas_src>

<mosaic_0001>
module attributes {stable_mosaic.version = 11 : i64} {
  func.func @_resnet_back_kernel(%arg0: i32, %arg1: memref<2x512x64xf32, #tpu.memory_space<vmem>>, %arg2: memref<512x128xf32, #tpu.memory_space<vmem>>, %arg3: memref<1x128xf32, #tpu.memory_space<vmem>>, %arg4: memref<2x128xf32, #tpu.memory_space<vmem>>) attributes {dimension_semantics = [#tpu.dimension_semantics<parallel>], iteration_bounds = array<i64: 1>, scalar_prefetch = 0 : i64, scratch_operands = 0 : i64, tpu.core_type = #tpu.core_type<tc>, window_params = [{transform_indices = @transform_0, window_bounds = array<i64: 2, 512, 64>}, {pipeline_mode = #tpu.pipeline_mode<synchronous>, transform_indices = @transform_1, window_bounds = array<i64: 512, 128>}, {pipeline_mode = #tpu.pipeline_mode<synchronous>, transform_indices = @transform_2, window_bounds = array<i64: 1, 128>}, {transform_indices = @transform_3, window_bounds = array<i64: 2, 128>}]} {
    %c0 = arith.constant 0 : index
    %c0_0 = arith.constant 0 : index
    %c0_1 = arith.constant 0 : index
    %0 = vector.load %arg1[%c0, %c0_0, %c0_1] : memref<2x512x64xf32, #tpu.memory_space<vmem>>, vector<2x512x64xf32>
    %cst = arith.constant dense<0.000000e+00> : vector<2x512xf32>
    %1 = vector.multi_reduction <add>, %0, %cst [2] : vector<2x512x64xf32> to vector<2x512xf32>
    %c0_2 = arith.constant 0 : index
    %c0_3 = arith.constant 0 : index
    %2 = vector.load %arg2[%c0_2, %c0_3] : memref<512x128xf32, #tpu.memory_space<vmem>>, vector<512x128xf32>
    %cst_4 = arith.constant dense<0.000000e+00> : vector<2x128xf32>
    %3 = tpu.matmul %1, %2, %cst_4 {dimension_numbers = #tpu.dot_dimension_numbers<[1], [0], [0], [1], [0, 0, 1, 1], [], []>} : vector<2x512xf32>, vector<512x128xf32>, vector<2x128xf32> -> vector<2x128xf32>
    %c0_5 = arith.constant 0 : index
    %c0_6 = arith.constant 0 : index
    %4 = vector.load %arg3[%c0_5, %c0_6] : memref<1x128xf32, #tpu.memory_space<vmem>>, vector<1x128xf32>
    %5 = vector.broadcast %4 : vector<1x128xf32> to vector<2x128xf32>
    %6 = arith.addf %3, %5 : vector<2x128xf32>
    %c0_7 = arith.constant 0 : index
    %c0_8 = arith.constant 0 : index
    %7 = vector.load %arg4[%c0_7, %c0_8] : memref<2x128xf32, #tpu.memory_space<vmem>>, vector<2x128xf32>
    tpu.vector_store %arg4[%c0_7, %c0_8], %6 {strides = array<i32>} : memref<2x128xf32, #tpu.memory_space<vmem>>, vector<2x128xf32>,
    return
  }
  func.func @transform_0(%arg0: i32) -> (i32, i32, i32) {
    %c0_i32 = arith.constant 0 : i32
    %c0_i32_0 = arith.constant 0 : i32
    %c0_i32_1 = arith.constant 0 : i32
    return %arg0, %c0_i32, %c0_i32_0 : i32, i32, i32
  }
  func.func @transform_1(%arg0: i32) -> (i32, i32) {
    %c0_i32 = arith.constant 0 : i32
    %c0_i32_0 = arith.constant 0 : i32
    %c0_i32_1 = arith.constant 0 : i32
    return %c0_i32, %c0_i32_0 : i32, i32
  }
  func.func @transform_2(%arg0: i32) -> (i32, i32) {
    %c0_i32 = arith.constant 0 : i32
    %c0_i32_0 = arith.constant 0 : i32
    %c0_i32_1 = arith.constant 0 : i32
    return %c0_i32, %c0_i32_0 : i32, i32
  }
  func.func @transform_3(%arg0: i32) -> (i32, i32) {
    %c0_i32 = arith.constant 0 : i32
    %c0_i32_0 = arith.constant 0 : i32
    return %arg0, %c0_i32 : i32, i32
  }
}

</mosaic_0001>

<llo_original>
// kernel: tpu_custom_call.1
$region0: #{tpu_custom_call.1}
  #allocation0 [shape = 'u32[]', space=smem, size = 0x4, offset = 0x4, fixed_abs, tag = 'smem constant byte address 0x4 - core index']
  #allocation1 [shape = 'u32[144,128]{1,0:T(1,128)}', space=vmem, size = 0x12000, scoped, tag = 'internal scratch']
  %s0 = inlined_call_operand.vmem [shape: f32[2,512,64], index: 0, kind: input, shape index: {}]
  %s1 = inlined_call_operand.vmem [shape: f32[512,128], index: 1, kind: input, shape index: {}]
  %s2 = inlined_call_operand.vmem [shape: f32[1,128], index: 2, kind: input, shape index: {}]
  %s3 = inlined_call_operand.hbm [shape: f32[2,128], index: 3, kind: output, shape index: {}]
  %s4 = sld [smem:[#allocation0]]
  $region22: #{tpu_custom_call.1} parent=0
    _
  %s6 = ssub.s32 1, %s4
  %s7 = scalar_select 0, %s6, %s4
  $region1: #{tpu_custom_call.1} parent=0
    #allocation2 [shape = 'u8[1024]{0}', space=vmem, size = 0x400, scoped, tag = 'output window, operand 0, single buffered']
    #allocation3 [shape = 's32[1]{0}', space=sflag, size = 0x4, scoped, tag = 'scoped memory for tpu_custom_call.1']
    %8 = vsyncpa [#allocation3], 0
    // Predicated region
    $region2: #{tpu_custom_call.1} parent=1 // pred_check
      _
    $region3: #{tpu_custom_call.1} parent=1 // pred_check_branch
      %10 = sbr.rel (0) target = $region5
    $region4: #{tpu_custom_call.1} parent=1 // pred_region
      _
    $region5: #{tpu_custom_call.1} parent=1 // pred_fallthru
      _
    // Predicated region
    $region6: #{tpu_custom_call.1} parent=1 // pred_check
      _
    $region7: #{tpu_custom_call.1} parent=1 // pred_check_branch
      %12 = sbr.rel (0) target = $region9
    $region8: #{tpu_custom_call.1} parent=1 // pred_region
      _
    $region9: #{tpu_custom_call.1} parent=1 // pred_fallthru
      _
    // Predicated region
    $region10: #{tpu_custom_call.1} parent=1 // pred_check
      _
    $region11: #{tpu_custom_call.1} parent=1 // pred_check_branch
      %14 = sbr.rel (0) target = $region13
    $region12: #{tpu_custom_call.1} parent=1 // pred_region
      _
    $region13: #{tpu_custom_call.1} parent=1 // pred_fallthru
      _
    %v15 = vld [vmem:[%s0] sm:$0xff]
    %v16 = vld [vmem:[%s0 + $0x8] sm:$0xff]
    %v17 = vld [vmem:[%s0 + $0x10] sm:$0xff]
    %v18 = vld [vmem:[%s0 + $0x18] sm:$0xff]
    %v19 = vld [vmem:[%s0 + $0x20] sm:$0xff]
    %v20 = vld [vmem:[%s0 + $0x28] sm:$0xff]
    %v21 = vld [vmem:[%s0 + $0x30] sm:$0xff]
    %v22 = vld [vmem:[%s0 + $0x38] sm:$0xff]
    %v23 = vld [vmem:[%s0 + $0x40] sm:$0xff]
    %v24 = vld [vmem:[%s0 + $0x48] sm:$0xff]
    %v25 = vld [vmem:[%s0 + $0x50] sm:$0xff]
    %v26 = vld [vmem:[%s0 + $0x58] sm:$0xff]
    %v27 = vld [vmem:[%s0 + $0x60] sm:$0xff]
    %v28 = vld [vmem:[%s0 + $0x68] sm:$0xff]
    %v29 = vld [vmem:[%s0 + $0x70] sm:$0xff]
    %v30 = vld [vmem:[%s0 + $0x78] sm:$0xff]
    %v31 = vld [vmem:[%s0 + $0x80] sm:$0xff]
    %v32 = vld [vmem:[%s0 + $0x88] sm:$0xff]
    %v33 = vld [vmem:[%s0 + $0x90] sm:$0xff]
    %v34 = vld [vmem:[%s0 + $0x98] sm:$0xff]
    %v35 = vld [vmem:[%s0 + $0xa0] sm:$0xff]
    %v36 = vld [vmem:[%s0 + $0xa8] sm:$0xff]
    %v37 = vld [vmem:[%s0 + $0xb0] sm:$0xff]
    %v38 = vld [vmem:[%s0 + $0xb8] sm:$0xff]
    %v39 = vld [vmem:[%s0 + $0xc0] sm:$0xff]
    %v40 = vld [vmem:[%s0 + $0xc8] sm:$0xff]
    %v41 = vld [vmem:[%s0 + $0xd0] sm:$0xff]
    %v42 = vld [vmem:[%s0 + $0xd8] sm:$0xff]
    %v43 = vld [vmem:[%s0 + $0xe0] sm:$0xff]
    %v44 = vld [vmem:[%s0 + $0xe8] sm:$0xff]
    %v45 = vld [vmem:[%s0 + $0xf0] sm:$0xff]
    %v46 = vld [vmem:[%s0 + $0xf8] sm:$0xff]
    %v47 = vld [vmem:[%s0 + $0x100] sm:$0xff]
    %v48 = vld [vmem:[%s0 + $0x108] sm:$0xff]
    %v49 = vld [vmem:[%s0 + $0x110] sm:$0xff]
    %v50 = vld [vmem:[%s0 + $0x118] sm:$0xff]
    %v51 = vld [vmem:[%s0 + $0x120] sm:$0xff]
    %v52 = vld [vmem:[%s0 + $0x128] sm:$0xff]
    %v53 = vld [vmem:[%s0 + $0x130] sm:$0xff]
    %v54 = vld [vmem:[%s0 + $0x138] sm:$0xff]
    %v55 = vld [vmem:[%s0 + $0x140] sm:$0xff]
    %v56 = vld [vmem:[%s0 + $0x148] sm:$0xff]
    %v57 = vld [vmem:[%s0 + $0x150] sm:$0xff]
    %v58 = vld [vmem:[%s0 + $0x158] sm:$0xff]
    %v59 = vld [vmem:[%s0 + $0x160] sm:$0xff]
    %v60 = vld [vmem:[%s0 + $0x168] sm:$0xff]
    %v61 = vld [vmem:[%s0 + $0x170] sm:$0xff]
    %v62 = vld [vmem:[%s0 + $0x178] sm:$0xff]
    %v63 = vld [vmem:[%s0 + $0x180] sm:$0xff]
    %v64 = vld [vmem:[%s0 + $0x188] sm:$0xff]
    %v65 = vld [vmem:[%s0 + $0x190] sm:$0xff]
    %v66 = vld [vmem:[%s0 + $0x198] sm:$0xff]
    %v67 = vld [vmem:[%s0 + $0x1a0] sm:$0xff]
    %v68 = vld [vmem:[%s0 + $0x1a8] sm:$0xff]
    %v69 = vld [vmem:[%s0 + $0x1b0] sm:$0xff]
    %v70 = vld [vmem:[%s0 + $0x1b8] sm:$0xff]
    %v71 = vld [vmem:[%s0 + $0x1c0] sm:$0xff]
    %v72 = vld [vmem:[%s0 + $0x1c8] sm:$0xff]
    %v73 = vld [vmem:[%s0 + $0x1d0] sm:$0xff]
    %v74 = vld [vmem:[%s0 + $0x1d8] sm:$0xff]
    %v75 = vld [vmem:[%s0 + $0x1e0] sm:$0xff]
    %v76 = vld [vmem:[%s0 + $0x1e8] sm:$0xff]
    %v77 = vld [vmem:[%s0 + $0x1f0] sm:$0xff]
    %v78 = vld [vmem:[%s0 + $0x1f8] sm:$0xff]
    %v79 = vld [vmem:[%s0 + $0x200] sm:$0xff]
    %v80 = vld [vmem:[%s0 + $0x208] sm:$0xff]
    %v81 = vld [vmem:[%s0 + $0x210] sm:$0xff]
    %v82 = vld [vmem:[%s0 + $0x218] sm:$0xff]
    %v83 = vld [vmem:[%s0 + $0x220] sm:$0xff]
    %v84 = vld [vmem:[%s0 + $0x228] sm:$0xff]
    %v85 = vld [vmem:[%s0 + $0x230] sm:$0xff]
    %v86 = vld [vmem:[%s0 + $0x238] sm:$0xff]
    %v87 = vld [vmem:[%s0 + $0x240] sm:$0xff]
    %v88 = vld [vmem:[%s0 + $0x248] sm:$0xff]
    %v89 = vld [vmem:[%s0 + $0x250] sm:$0xff]
    %v90 = vld [vmem:[%s0 + $0x258] sm:$0xff]
    %v91 = vld [vmem:[%s0 + $0x260] sm:$0xff]
    %v92 = vld [vmem:[%s0 + $0x268] sm:$0xff]
    %v93 = vld [vmem:[%s0 + $0x270] sm:$0xff]
    %v94 = vld [vmem:[%s0 + $0x278] sm:$0xff]
    %v95 = vld [vmem:[%s0 + $0x280] sm:$0xff]
    %v96 = vld [vmem:[%s0 + $0x288] sm:$0xff]
    %v97 = vld [vmem:[%s0 + $0x290] sm:$0xff]
    %v98 = vld [vmem:[%s0 + $0x298] sm:$0xff]
    %v99 = vld [vmem:[%s0 + $0x2a0] sm:$0xff]
    %v100 = vld [vmem:[%s0 + $0x2a8] sm:$0xff]
    %v101 = vld [vmem:[%s0 + $0x2b0] sm:$0xff]
    %v102 = vld [vmem:[%s0 + $0x2b8] sm:$0xff]
    %v103 = vld [vmem:[%s0 + $0x2c0] sm:$0xff]
    %v104 = vld [vmem:[%s0 + $0x2c8] sm:$0xff]
    %v105 = vld [vmem:[%s0 + $0x2d0] sm:$0xff]
    %v106 = vld [vmem:[%s0 + $0x2d8] sm:$0xff]
    %v107 = vld [vmem:[%s0 + $0x2e0] sm:$0xff]
    %v108 = vld [vmem:[%s0 + $0x2e8] sm:$0xff]
    %v109 = vld [vmem:[%s0 + $0x2f0] sm:$0xff]
    %v110 = vld [vmem:[%s0 + $0x2f8] sm:$0xff]
    %v111 = vld [vmem:[%s0 + $0x300] sm:$0xff]
    %v112 = vld [vmem:[%s0 + $0x308] sm:$0xff]
    %v113 = vld [vmem:[%s0 + $0x310] sm:$0xff]
    %v114 = vld [vmem:[%s0 + $0x318] sm:$0xff]
    %v115 = vld [vmem:[%s0 + $0x320] sm:$0xff]
    %v116 = vld [vmem:[%s0 + $0x328] sm:$0xff]
    %v117 = vld [vmem:[%s0 + $0x330] sm:$0xff]
    %v118 = vld [vmem:[%s0 + $0x338] sm:$0xff]
    %v119 = vld [vmem:[%s0 + $0x340] sm:$0xff]
    %v120 = vld [vmem:[%s0 + $0x348] sm:$0xff]
    %v121 = vld [vmem:[%s0 + $0x350] sm:$0xff]
    %v122 = vld [vmem:[%s0 + $0x358] sm:$0xff]
    %v123 = vld [vmem:[%s0 + $0x360] sm:$0xff]
    %v124 = vld [vmem:[%s0 + $0x368] sm:$0xff]
    %v125 = vld [vmem:[%s0 + $0x370] sm:$0xff]
    %v126 = vld [vmem:[%s0 + $0x378] sm:$0xff]
    %v127 = vld [vmem:[%s0 + $0x380] sm:$0xff]
    %v128 = vld [vmem:[%s0 + $0x388] sm:$0xff]
    %v129 = vld [vmem:[%s0 + $0x390] sm:$0xff]
    %v130 = vld [vmem:[%s0 + $0x398] sm:$0xff]
    %v131 = vld [vmem:[%s0 + $0x3a0] sm:$0xff]
    %v132 = vld [vmem:[%s0 + $0x3a8] sm:$0xff]
    %v133 = vld [vmem:[%s0 + $0x3b0] sm:$0xff]
    %v134 = vld [vmem:[%s0 + $0x3b8] sm:$0xff]
    %v135 = vld [vmem:[%s0 + $0x3c0] sm:$0xff]
    %v136 = vld [vmem:[%s0 + $0x3c8] sm:$0xff]
    %v137 = vld [vmem:[%s0 + $0x3d0] sm:$0xff]
    %v138 = vld [vmem:[%s0 + $0x3d8] sm:$0xff]
    %v139 = vld [vmem:[%s0 + $0x3e0] sm:$0xff]
    %v140 = vld [vmem:[%s0 + $0x3e8] sm:$0xff]
    %v141 = vld [vmem:[%s0 + $0x3f0] sm:$0xff]
    %v142 = vld [vmem:[%s0 + $0x3f8] sm:$0xff]
    %vm143 = vcmask 523264
    %v144 = vsel %vm143, %v15, 0.0
    %145 = vadd.xlane.f32.xlu0 %v144
    %v146 = vpop.xlane.xlu0 %145
    %v147 = vsel %vm143, %v16, 0.0
    %148 = vadd.xlane.f32.xlu0 %v147
    %v149 = vpop.xlane.xlu0 %148
    %v150 = vsel %vm143, %v17, 0.0
    %151 = vadd.xlane.f32.xlu0 %v150
    %v152 = vpop.xlane.xlu0 %151
    %v153 = vsel %vm143, %v18, 0.0
    %154 = vadd.xlane.f32.xlu0 %v153
    %v155 = vpop.xlane.xlu0 %154
    %v156 = vsel %vm143, %v19, 0.0
    %157 = vadd.xlane.f32.xlu0 %v156
    %v158 = vpop.xlane.xlu0 %157
    %v159 = vsel %vm143, %v20, 0.0
    %160 = vadd.xlane.f32.xlu0 %v159
    %v161 = vpop.xlane.xlu0 %160
    %v162 = vsel %vm143, %v21, 0.0
    %163 = vadd.xlane.f32.xlu0 %v162
    %v164 = vpop.xlane.xlu0 %163
    %v165 = vsel %vm143, %v22, 0.0
    %166 = vadd.xlane.f32.xlu0 %v165
    %v167 = vpop.xlane.xlu0 %166
    %v168 = vsel %vm143, %v23, 0.0
    %169 = vadd.xlane.f32.xlu0 %v168
    %v170 = vpop.xlane.xlu0 %169
    %v171 = vsel %vm143, %v24, 0.0
    %172 = vadd.xlane.f32.xlu0 %v171
    %v173 = vpop.xlane.xlu0 %172
    %v174 = vsel %vm143, %v25, 0.0
    %175 = vadd.xlane.f32.xlu0 %v174
    %v176 = vpop.xlane.xlu0 %175
    %v177 = vsel %vm143, %v26, 0.0
    %178 = vadd.xlane.f32.xlu0 %v177
    %v179 = vpop.xlane.xlu0 %178
    %v180 = vsel %vm143, %v27, 0.0
    %181 = vadd.xlane.f32.xlu0 %v180
    %v182 = vpop.xlane.xlu0 %181
    %v183 = vsel %vm143, %v28, 0.0
    %184 = vadd.xlane.f32.xlu0 %v183
    %v185 = vpop.xlane.xlu0 %184
    %v186 = vsel %vm143, %v29, 0.0
    %187 = vadd.xlane.f32.xlu0 %v186
    %v188 = vpop.xlane.xlu0 %187
    %v189 = vsel %vm143, %v30, 0.0
    %190 = vadd.xlane.f32.xlu0 %v189
    %v191 = vpop.xlane.xlu0 %190
    %v192 = vsel %vm143, %v31, 0.0
    %193 = vadd.xlane.f32.xlu0 %v192
    %v194 = vpop.xlane.xlu0 %193
    %v195 = vsel %vm143, %v32, 0.0
    %196 = vadd.xlane.f32.xlu0 %v195
    %v197 = vpop.xlane.xlu0 %196
    %v198 = vsel %vm143, %v33, 0.0
    %199 = vadd.xlane.f32.xlu0 %v198
    %v200 = vpop.xlane.xlu0 %199
    %v201 = vsel %vm143, %v34, 0.0
    %202 = vadd.xlane.f32.xlu0 %v201
    %v203 = vpop.xlane.xlu0 %202
    %v204 = vsel %vm143, %v35, 0.0
    %205 = vadd.xlane.f32.xlu0 %v204
    %v206 = vpop.xlane.xlu0 %205
    %v207 = vsel %vm143, %v36, 0.0
    %208 = vadd.xlane.f32.xlu0 %v207
    %v209 = vpop.xlane.xlu0 %208
    %v210 = vsel %vm143, %v37, 0.0
    %211 = vadd.xlane.f32.xlu0 %v210
    %v212 = vpop.xlane.xlu0 %211
    %v213 = vsel %vm143, %v38, 0.0
    %214 = vadd.xlane.f32.xlu0 %v213
    %v215 = vpop.xlane.xlu0 %214
    %v216 = vsel %vm143, %v39, 0.0
    %217 = vadd.xlane.f32.xlu0 %v216
    %v218 = vpop.xlane.xlu0 %217
    %v219 = vsel %vm143, %v40, 0.0
    %220 = vadd.xlane.f32.xlu0 %v219
    %v221 = vpop.xlane.xlu0 %220
    %v222 = vsel %vm143, %v41, 0.0
    %223 = vadd.xlane.f32.xlu0 %v222
    %v224 = vpop.xlane.xlu0 %223
    %v225 = vsel %vm143, %v42, 0.0
    %226 = vadd.xlane.f32.xlu0 %v225
    %v227 = vpop.xlane.xlu0 %226
    %v228 = vsel %vm143, %v43, 0.0
    %229 = vadd.xlane.f32.xlu0 %v228
    %v230 = vpop.xlane.xlu0 %229
    %v231 = vsel %vm143, %v44, 0.0
    %232 = vadd.xlane.f32.xlu0 %v231
    %v233 = vpop.xlane.xlu0 %232
    %v234 = vsel %vm143, %v45, 0.0
    %235 = vadd.xlane.f32.xlu0 %v234
    %v236 = vpop.xlane.xlu0 %235
    %v237 = vsel %vm143, %v46, 0.0
    %238 = vadd.xlane.f32.xlu0 %v237
    %v239 = vpop.xlane.xlu0 %238
    %v240 = vsel %vm143, %v47, 0.0
    %241 = vadd.xlane.f32.xlu0 %v240
    %v242 = vpop.xlane.xlu0 %241
    %v243 = vsel %vm143, %v48, 0.0
    %244 = vadd.xlane.f32.xlu0 %v243
    %v245 = vpop.xlane.xlu0 %244
    %v246 = vsel %vm143, %v49, 0.0
    %247 = vadd.xlane.f32.xlu0 %v246
    %v248 = vpop.xlane.xlu0 %247
    %v249 = vsel %vm143, %v50, 0.0
    %250 = vadd.xlane.f32.xlu0 %v249
    %v251 = vpop.xlane.xlu0 %250
    %v252 = vsel %vm143, %v51, 0.0
    %253 = vadd.xlane.f32.xlu0 %v252
    %v254 = vpop.xlane.xlu0 %253
    %v255 = vsel %vm143, %v52, 0.0
    %256 = vadd.xlane.f32.xlu0 %v255
    %v257 = vpop.xlane.xlu0 %256
    %v258 = vsel %vm143, %v53, 0.0
    %259 = vadd.xlane.f32.xlu0 %v258
    %v260 = vpop.xlane.xlu0 %259
    %v261 = vsel %vm143, %v54, 0.0
    %262 = vadd.xlane.f32.xlu0 %v261
    %v263 = vpop.xlane.xlu0 %262
    %v264 = vsel %vm143, %v55, 0.0
    %265 = vadd.xlane.f32.xlu0 %v264
    %v266 = vpop.xlane.xlu0 %265
    %v267 = vsel %vm143, %v56, 0.0
    %268 = vadd.xlane.f32.xlu0 %v267
    %v269 = vpop.xlane.xlu0 %268
    %v270 = vsel %vm143, %v57, 0.0
    %271 = vadd.xlane.f32.xlu0 %v270
    %v272 = vpop.xlane.xlu0 %271
    %v273 = vsel %vm143, %v58, 0.0
    %274 = vadd.xlane.f32.xlu0 %v273
    %v275 = vpop.xlane.xlu0 %274
    %v276 = vsel %vm143, %v59, 0.0
    %277 = vadd.xlane.f32.xlu0 %v276
    %v278 = vpop.xlane.xlu0 %277
    %v279 = vsel %vm143, %v60, 0.0
    %280 = vadd.xlane.f32.xlu0 %v279
    %v281 = vpop.xlane.xlu0 %280
    %v282 = vsel %vm143, %v61, 0.0
    %283 = vadd.xlane.f32.xlu0 %v282
    %v284 = vpop.xlane.xlu0 %283
    %v285 = vsel %vm143, %v62, 0.0
    %286 = vadd.xlane.f32.xlu0 %v285
    %v287 = vpop.xlane.xlu0 %286
    %v288 = vsel %vm143, %v63, 0.0
    %289 = vadd.xlane.f32.xlu0 %v288
    %v290 = vpop.xlane.xlu0 %289
    %v291 = vsel %vm143, %v64, 0.0
    %292 = vadd.xlane.f32.xlu0 %v291
    %v293 = vpop.xlane.xlu0 %292
    %v294 = vsel %vm143, %v65, 0.0
    %295 = vadd.xlane.f32.xlu0 %v294
    %v296 = vpop.xlane.xlu0 %295
    %v297 = vsel %vm143, %v66, 0.0
    %298 = vadd.xlane.f32.xlu0 %v297
    %v299 = vpop.xlane.xlu0 %298
    %v300 = vsel %vm143, %v67, 0.0
    %301 = vadd.xlane.f32.xlu0 %v300
    %v302 = vpop.xlane.xlu0 %301
    %v303 = vsel %vm143, %v68, 0.0
    %304 = vadd.xlane.f32.xlu0 %v303
    %v305 = vpop.xlane.xlu0 %304
    %v306 = vsel %vm143, %v69, 0.0
    %307 = vadd.xlane.f32.xlu0 %v306
    %v308 = vpop.xlane.xlu0 %307
    %v309 = vsel %vm143, %v70, 0.0
    %310 = vadd.xlane.f32.xlu0 %v309
    %v311 = vpop.xlane.xlu0 %310
    %v312 = vsel %vm143, %v71, 0.0
    %313 = vadd.xlane.f32.xlu0 %v312
    %v314 = vpop.xlane.xlu0 %313
    %v315 = vsel %vm143, %v72, 0.0
    %316 = vadd.xlane.f32.xlu0 %v315
    %v317 = vpop.xlane.xlu0 %316
    %v318 = vsel %vm143, %v73, 0.0
    %319 = vadd.xlane.f32.xlu0 %v318
    %v320 = vpop.xlane.xlu0 %319
    %v321 = vsel %vm143, %v74, 0.0
    %322 = vadd.xlane.f32.xlu0 %v321
    %v323 = vpop.xlane.xlu0 %322
    %v324 = vsel %vm143, %v75, 0.0
    %325 = vadd.xlane.f32.xlu0 %v324
    %v326 = vpop.xlane.xlu0 %325
    %v327 = vsel %vm143, %v76, 0.0
    %328 = vadd.xlane.f32.xlu0 %v327
    %v329 = vpop.xlane.xlu0 %328
    %v330 = vsel %vm143, %v77, 0.0
    %331 = vadd.xlane.f32.xlu0 %v330
    %v332 = vpop.xlane.xlu0 %331
    %v333 = vsel %vm143, %v78, 0.0
    %334 = vadd.xlane.f32.xlu0 %v333
    %v335 = vpop.xlane.xlu0 %334
    %v336 = vsel %vm143, %v79, 0.0
    %337 = vadd.xlane.f32.xlu0 %v336
    %v338 = vpop.xlane.xlu0 %337
    %v339 = vsel %vm143, %v80, 0.0
    %340 = vadd.xlane.f32.xlu0 %v339
    %v341 = vpop.xlane.xlu0 %340
    %v342 = vsel %vm143, %v81, 0.0
    %343 = vadd.xlane.f32.xlu0 %v342
    %v344 = vpop.xlane.xlu0 %343
    %v345 = vsel %vm143, %v82, 0.0
    %346 = vadd.xlane.f32.xlu0 %v345
    %v347 = vpop.xlane.xlu0 %346
    %v348 = vsel %vm143, %v83, 0.0
    %349 = vadd.xlane.f32.xlu0 %v348
    %v350 = vpop.xlane.xlu0 %349
    %v351 = vsel %vm143, %v84, 0.0
    %352 = vadd.xlane.f32.xlu0 %v351
    %v353 = vpop.xlane.xlu0 %352
    %v354 = vsel %vm143, %v85, 0.0
    %355 = vadd.xlane.f32.xlu0 %v354
    %v356 = vpop.xlane.xlu0 %355
    %v357 = vsel %vm143, %v86, 0.0
    %358 = vadd.xlane.f32.xlu0 %v357
    %v359 = vpop.xlane.xlu0 %358
    %v360 = vsel %vm143, %v87, 0.0
    %361 = vadd.xlane.f32.xlu0 %v360
    %v362 = vpop.xlane.xlu0 %361
    %v363 = vsel %vm143, %v88, 0.0
    %364 = vadd.xlane.f32.xlu0 %v363
    %v365 = vpop.xlane.xlu0 %364
    %v366 = vsel %vm143, %v89, 0.0
    %367 = vadd.xlane.f32.xlu0 %v366
    %v368 = vpop.xlane.xlu0 %367
    %v369 = vsel %vm143, %v90, 0.0
    %370 = vadd.xlane.f32.xlu0 %v369
    %v371 = vpop.xlane.xlu0 %370
    %v372 = vsel %vm143, %v91, 0.0
    %373 = vadd.xlane.f32.xlu0 %v372
    %v374 = vpop.xlane.xlu0 %373
    %v375 = vsel %vm143, %v92, 0.0
    %376 = vadd.xlane.f32.xlu0 %v375
    %v377 = vpop.xlane.xlu0 %376
    %v378 = vsel %vm143, %v93, 0.0
    %379 = vadd.xlane.f32.xlu0 %v378
    %v380 = vpop.xlane.xlu0 %379
    %v381 = vsel %vm143, %v94, 0.0
    %382 = vadd.xlane.f32.xlu0 %v381
    %v383 = vpop.xlane.xlu0 %382
    %v384 = vsel %vm143, %v95, 0.0
    %385 = vadd.xlane.f32.xlu0 %v384
    %v386 = vpop.xlane.xlu0 %385
    %v387 = vsel %vm143, %v96, 0.0
    %388 = vadd.xlane.f32.xlu0 %v387
    %v389 = vpop.xlane.xlu0 %388
    %v390 = vsel %vm143, %v97, 0.0
    %391 = vadd.xlane.f32.xlu0 %v390
    %v392 = vpop.xlane.xlu0 %391
    %v393 = vsel %vm143, %v98, 0.0
    %394 = vadd.xlane.f32.xlu0 %v393
    %v395 = vpop.xlane.xlu0 %394
    %v396 = vsel %vm143, %v99, 0.0
    %397 = vadd.xlane.f32.xlu0 %v396
    %v398 = vpop.xlane.xlu0 %397
    %v399 = vsel %vm143, %v100, 0.0
    %400 = vadd.xlane.f32.xlu0 %v399
    %v401 = vpop.xlane.xlu0 %400
    %v402 = vsel %vm143, %v101, 0.0
    %403 = vadd.xlane.f32.xlu0 %v402
    %v404 = vpop.xlane.xlu0 %403
    %v405 = vsel %vm143, %v102, 0.0
    %406 = vadd.xlane.f32.xlu0 %v405
    %v407 = vpop.xlane.xlu0 %406
    %v408 = vsel %vm143, %v103, 0.0
    %409 = vadd.xlane.f32.xlu0 %v408
    %v410 = vpop.xlane.xlu0 %409
    %v411 = vsel %vm143, %v104, 0.0
    %412 = vadd.xlane.f32.xlu0 %v411
    %v413 = vpop.xlane.xlu0 %412
    %v414 = vsel %vm143, %v105, 0.0
    %415 = vadd.xlane.f32.xlu0 %v414
    %v416 = vpop.xlane.xlu0 %415
    %v417 = vsel %vm143, %v106, 0.0
    %418 = vadd.xlane.f32.xlu0 %v417
    %v419 = vpop.xlane.xlu0 %418
    %v420 = vsel %vm143, %v107, 0.0
    %421 = vadd.xlane.f32.xlu0 %v420
    %v422 = vpop.xlane.xlu0 %421
    %v423 = vsel %vm143, %v108, 0.0
    %424 = vadd.xlane.f32.xlu0 %v423
    %v425 = vpop.xlane.xlu0 %424
    %v426 = vsel %vm143, %v109, 0.0
    %427 = vadd.xlane.f32.xlu0 %v426
    %v428 = vpop.xlane.xlu0 %427
    %v429 = vsel %vm143, %v110, 0.0
    %430 = vadd.xlane.f32.xlu0 %v429
    %v431 = vpop.xlane.xlu0 %430
    %v432 = vsel %vm143, %v111, 0.0
    %433 = vadd.xlane.f32.xlu0 %v432
    %v434 = vpop.xlane.xlu0 %433
    %v435 = vsel %vm143, %v112, 0.0
    %436 = vadd.xlane.f32.xlu0 %v435
    %v437 = vpop.xlane.xlu0 %436
    %v438 = vsel %vm143, %v113, 0.0
    %439 = vadd.xlane.f32.xlu0 %v438
    %v440 = vpop.xlane.xlu0 %439
    %v441 = vsel %vm143, %v114, 0.0
    %442 = vadd.xlane.f32.xlu0 %v441
    %v443 = vpop.xlane.xlu0 %442
    %v444 = vsel %vm143, %v115, 0.0
    %445 = vadd.xlane.f32.xlu0 %v444
    %v446 = vpop.xlane.xlu0 %445
    %v447 = vsel %vm143, %v116, 0.0
    %448 = vadd.xlane.f32.xlu0 %v447
    %v449 = vpop.xlane.xlu0 %448
    %v450 = vsel %vm143, %v117, 0.0
    %451 = vadd.xlane.f32.xlu0 %v450
    %v452 = vpop.xlane.xlu0 %451
    %v453 = vsel %vm143, %v118, 0.0
    %454 = vadd.xlane.f32.xlu0 %v453
    %v455 = vpop.xlane.xlu0 %454
    %v456 = vsel %vm143, %v119, 0.0
    %457 = vadd.xlane.f32.xlu0 %v456
    %v458 = vpop.xlane.xlu0 %457
    %v459 = vsel %vm143, %v120, 0.0
    %460 = vadd.xlane.f32.xlu0 %v459
    %v461 = vpop.xlane.xlu0 %460
    %v462 = vsel %vm143, %v121, 0.0
    %463 = vadd.xlane.f32.xlu0 %v462
    %v464 = vpop.xlane.xlu0 %463
    %v465 = vsel %vm143, %v122, 0.0
    %466 = vadd.xlane.f32.xlu0 %v465
    %v467 = vpop.xlane.xlu0 %466
    %v468 = vsel %vm143, %v123, 0.0
    %469 = vadd.xlane.f32.xlu0 %v468
    %v470 = vpop.xlane.xlu0 %469
    %v471 = vsel %vm143, %v124, 0.0
    %472 = vadd.xlane.f32.xlu0 %v471
    %v473 = vpop.xlane.xlu0 %472
    %v474 = vsel %vm143, %v125, 0.0
    %475 = vadd.xlane.f32.xlu0 %v474
    %v476 = vpop.xlane.xlu0 %475
    %v477 = vsel %vm143, %v126, 0.0
    %478 = vadd.xlane.f32.xlu0 %v477
    %v479 = vpop.xlane.xlu0 %478
    %v480 = vsel %vm143, %v127, 0.0
    %481 = vadd.xlane.f32.xlu0 %v480
    %v482 = vpop.xlane.xlu0 %481
    %v483 = vsel %vm143, %v128, 0.0
    %484 = vadd.xlane.f32.xlu0 %v483
    %v485 = vpop.xlane.xlu0 %484
    %v486 = vsel %vm143, %v129, 0.0
    %487 = vadd.xlane.f32.xlu0 %v486
    %v488 = vpop.xlane.xlu0 %487
    %v489 = vsel %vm143, %v130, 0.0
    %490 = vadd.xlane.f32.xlu0 %v489
    %v491 = vpop.xlane.xlu0 %490
    %v492 = vsel %vm143, %v131, 0.0
    %493 = vadd.xlane.f32.xlu0 %v492
    %v494 = vpop.xlane.xlu0 %493
    %v495 = vsel %vm143, %v132, 0.0
    %496 = vadd.xlane.f32.xlu0 %v495
    %v497 = vpop.xlane.xlu0 %496
    %v498 = vsel %vm143, %v133, 0.0
    %499 = vadd.xlane.f32.xlu0 %v498
    %v500 = vpop.xlane.xlu0 %499
    %v501 = vsel %vm143, %v134, 0.0
    %502 = vadd.xlane.f32.xlu0 %v501
    %v503 = vpop.xlane.xlu0 %502
    %v504 = vsel %vm143, %v135, 0.0
    %505 = vadd.xlane.f32.xlu0 %v504
    %v506 = vpop.xlane.xlu0 %505
    %v507 = vsel %vm143, %v136, 0.0
    %508 = vadd.xlane.f32.xlu0 %v507
    %v509 = vpop.xlane.xlu0 %508
    %v510 = vsel %vm143, %v137, 0.0
    %511 = vadd.xlane.f32.xlu0 %v510
    %v512 = vpop.xlane.xlu0 %511
    %v513 = vsel %vm143, %v138, 0.0
    %514 = vadd.xlane.f32.xlu0 %v513
    %v515 = vpop.xlane.xlu0 %514
    %v516 = vsel %vm143, %v139, 0.0
    %517 = vadd.xlane.f32.xlu0 %v516
    %v518 = vpop.xlane.xlu0 %517
    %v519 = vsel %vm143, %v140, 0.0
    %520 = vadd.xlane.f32.xlu0 %v519
    %v521 = vpop.xlane.xlu0 %520
    %v522 = vsel %vm143, %v141, 0.0
    %523 = vadd.xlane.f32.xlu0 %v522
    %v524 = vpop.xlane.xlu0 %523
    %v525 = vsel %vm143, %v142, 0.0
    %526 = vadd.xlane.f32.xlu0 %v525
    %v527 = vpop.xlane.xlu0 %526
    %v528 = vld [vmem:[%s1] sm:$0xff]
    %v529 = vld [vmem:[%s1 + $0x8] sm:$0xff]
    %v530 = vld [vmem:[%s1 + $0x10] sm:$0xff]
    %v531 = vld [vmem:[%s1 + $0x18] sm:$0xff]
    %v532 = vld [vmem:[%s1 + $0x20] sm:$0xff]
    %v533 = vld [vmem:[%s1 + $0x28] sm:$0xff]
    %v534 = vld [vmem:[%s1 + $0x30] sm:$0xff]
    %v535 = vld [vmem:[%s1 + $0x38] sm:$0xff]
    %v536 = vld [vmem:[%s1 + $0x40] sm:$0xff]
    %v537 = vld [vmem:[%s1 + $0x48] sm:$0xff]
    %v538 = vld [vmem:[%s1 + $0x50] sm:$0xff]
    %v539 = vld [vmem:[%s1 + $0x58] sm:$0xff]
    %v540 = vld [vmem:[%s1 + $0x60] sm:$0xff]
    %v541 = vld [vmem:[%s1 + $0x68] sm:$0xff]
    %v542 = vld [vmem:[%s1 + $0x70] sm:$0xff]
    %v543 = vld [vmem:[%s1 + $0x78] sm:$0xff]
    %v544 = vld [vmem:[%s1 + $0x80] sm:$0xff]
    %v545 = vld [vmem:[%s1 + $0x88] sm:$0xff]
    %v546 = vld [vmem:[%s1 + $0x90] sm:$0xff]
    %v547 = vld [vmem:[%s1 + $0x98] sm:$0xff]
    %v548 = vld [vmem:[%s1 + $0xa0] sm:$0xff]
    %v549 = vld [vmem:[%s1 + $0xa8] sm:$0xff]
    %v550 = vld [vmem:[%s1 + $0xb0] sm:$0xff]
    %v551 = vld [vmem:[%s1 + $0xb8] sm:$0xff]
    %v552 = vld [vmem:[%s1 + $0xc0] sm:$0xff]
    %v553 = vld [vmem:[%s1 + $0xc8] sm:$0xff]
    %v554 = vld [vmem:[%s1 + $0xd0] sm:$0xff]
    %v555 = vld [vmem:[%s1 + $0xd8] sm:$0xff]
    %v556 = vld [vmem:[%s1 + $0xe0] sm:$0xff]
    %v557 = vld [vmem:[%s1 + $0xe8] sm:$0xff]
    %v558 = vld [vmem:[%s1 + $0xf0] sm:$0xff]
    %v559 = vld [vmem:[%s1 + $0xf8] sm:$0xff]
    %v560 = vld [vmem:[%s1 + $0x100] sm:$0xff]
    %v561 = vld [vmem:[%s1 + $0x108] sm:$0xff]
    %v562 = vld [vmem:[%s1 + $0x110] sm:$0xff]
    %v563 = vld [vmem:[%s1 + $0x118] sm:$0xff]
    %v564 = vld [vmem:[%s1 + $0x120] sm:$0xff]
    %v565 = vld [vmem:[%s1 + $0x128] sm:$0xff]
    %v566 = vld [vmem:[%s1 + $0x130] sm:$0xff]
    %v567 = vld [vmem:[%s1 + $0x138] sm:$0xff]
    %v568 = vld [vmem:[%s1 + $0x140] sm:$0xff]
    %v569 = vld [vmem:[%s1 + $0x148] sm:$0xff]
    %v570 = vld [vmem:[%s1 + $0x150] sm:$0xff]
    %v571 = vld [vmem:[%s1 + $0x158] sm:$0xff]
    %v572 = vld [vmem:[%s1 + $0x160] sm:$0xff]
    %v573 = vld [vmem:[%s1 + $0x168] sm:$0xff]
    %v574 = vld [vmem:[%s1 + $0x170] sm:$0xff]
    %v575 = vld [vmem:[%s1 + $0x178] sm:$0xff]
    %v576 = vld [vmem:[%s1 + $0x180] sm:$0xff]
    %v577 = vld [vmem:[%s1 + $0x188] sm:$0xff]
    %v578 = vld [vmem:[%s1 + $0x190] sm:$0xff]
    %v579 = vld [vmem:[%s1 + $0x198] sm:$0xff]
    %v580 = vld [vmem:[%s1 + $0x1a0] sm:$0xff]
    %v581 = vld [vmem:[%s1 + $0x1a8] sm:$0xff]
    %v582 = vld [vmem:[%s1 + $0x1b0] sm:$0xff]
    %v583 = vld [vmem:[%s1 + $0x1b8] sm:$0xff]
    %v584 = vld [vmem:[%s1 + $0x1c0] sm:$0xff]
    %v585 = vld [vmem:[%s1 + $0x1c8] sm:$0xff]
    %v586 = vld [vmem:[%s1 + $0x1d0] sm:$0xff]
    %v587 = vld [vmem:[%s1 + $0x1d8] sm:$0xff]
    %v588 = vld [vmem:[%s1 + $0x1e0] sm:$0xff]
    %v589 = vld [vmem:[%s1 + $0x1e8] sm:$0xff]
    %v590 = vld [vmem:[%s1 + $0x1f0] sm:$0xff]
    %v591 = vld [vmem:[%s1 + $0x1f8] sm:$0xff]
    %v592 = vld [vmem:[%s2] sm:$0x1]
    %v594 = vlaneseq
    %v595 = vshrl.u32 %v594, 7
    %v596 = vsub.s32 0, %v595
    %v597 = vrot.slane %v592, %v596
    %v727 = vlaneseq
    %v728 = vand.u32 %v727, 127
    %v729 = vlaneseq
    %v730 = vshrl.u32 %v729, 7
    %v731 = vsub.s32 %v728, %v730
    %v732 = vrot.slane %v146, %v731
    %v733 = vadd.s32 %v728, 4294967288
    %v734 = vlaneseq
    %v735 = vshrl.u32 %v734, 7
    %v736 = vsub.s32 %v733, %v735
    %v737 = vrot.slane %v149, %v736
    %vm738 = vcmask 130112
    %v739 = vsel %vm738, %v737, %v732
    %v740 = vadd.s32 %v728, 4294967280
    %v741 = vlaneseq
    %v742 = vshrl.u32 %v741, 7
    %v743 = vsub.s32 %v740, %v742
    %v744 = vrot.slane %v152, %v743
    %vm745 = vcmask 195712
    %v746 = vsel %vm745, %v744, %v739
    %v747 = vadd.s32 %v728, 4294967272
    %v748 = vlaneseq
    %v749 = vshrl.u32 %v748, 7
    %v750 = vsub.s32 %v747, %v749
    %v751 = vrot.slane %v155, %v750
    %vm752 = vcmask 261312
    %v753 = vsel %vm752, %v751, %v746
    %v754 = vadd.s32 %v728, 4294967264
    %v755 = vlaneseq
    %v756 = vshrl.u32 %v755, 7
    %v757 = vsub.s32 %v754, %v756
    %v758 = vrot.slane %v158, %v757
    %vm759 = vcmask 326912
    %v760 = vsel %vm759, %v758, %v753
    %v761 = vadd.s32 %v728, 4294967256
    %v762 = vlaneseq
    %v763 = vshrl.u32 %v762, 7
    %v764 = vsub.s32 %v761, %v763
    %v765 = vrot.slane %v161, %v764
    %vm766 = vcmask 392512
    %v767 = vsel %vm766, %v765, %v760
    %v768 = vadd.s32 %v728, 4294967248
    %v769 = vlaneseq
    %v770 = vshrl.u32 %v769, 7
    %v771 = vsub.s32 %v768, %v770
    %v772 = vrot.slane %v164, %v771
    %vm773 = vcmask 458112
    %v774 = vsel %vm773, %v772, %v767
    %v775 = vadd.s32 %v728, 4294967240
    %v776 = vlaneseq
    %v777 = vshrl.u32 %v776, 7
    %v778 = vsub.s32 %v775, %v777
    %v779 = vrot.slane %v167, %v778
    %vm780 = vcmask 523712
    %v781 = vsel %vm780, %v779, %v774
    %v782 = vadd.s32 %v728, 4294967232
    %v783 = vlaneseq
    %v784 = vshrl.u32 %v783, 7
    %v785 = vsub.s32 %v782, %v784
    %v786 = vrot.slane %v170, %v785
    %vm787 = vcmask 589312
    %v788 = vsel %vm787, %v786, %v781
    %v789 = vadd.s32 %v728, 4294967224
    %v790 = vlaneseq
    %v791 = vshrl.u32 %v790, 7
    %v792 = vsub.s32 %v789, %v791
    %v793 = vrot.slane %v173, %v792
    %vm794 = vcmask 654912
    %v795 = vsel %vm794, %v793, %v788
    %v796 = vadd.s32 %v728, 4294967216
    %v797 = vlaneseq
    %v798 = vshrl.u32 %v797, 7
    %v799 = vsub.s32 %v796, %v798
    %v800 = vrot.slane %v176, %v799
    %vm801 = vcmask 720512
    %v802 = vsel %vm801, %v800, %v795
    %v803 = vadd.s32 %v728, 4294967208
    %v804 = vlaneseq
    %v805 = vshrl.u32 %v804, 7
    %v806 = vsub.s32 %v803, %v805
    %v807 = vrot.slane %v179, %v806
    %vm808 = vcmask 786112
    %v809 = vsel %vm808, %v807, %v802
    %v810 = vadd.s32 %v728, 4294967200
    %v811 = vlaneseq
    %v812 = vshrl.u32 %v811, 7
    %v813 = vsub.s32 %v810, %v812
    %v814 = vrot.slane %v182, %v813
    %vm815 = vcmask 851712
    %v816 = vsel %vm815, %v814, %v809
    %v817 = vadd.s32 %v728, 4294967192
    %v818 = vlaneseq
    %v819 = vshrl.u32 %v818, 7
    %v820 = vsub.s32 %v817, %v819
    %v821 = vrot.slane %v185, %v820
    %vm822 = vcmask 917312
    %v823 = vsel %vm822, %v821, %v816
    %v824 = vadd.s32 %v728, 4294967184
    %v825 = vlaneseq
    %v826 = vshrl.u32 %v825, 7
    %v827 = vsub.s32 %v824, %v826
    %v828 = vrot.slane %v188, %v827
    %vm829 = vcmask 982912
    %v830 = vsel %vm829, %v828, %v823
    %v831 = vadd.s32 %v728, 4294967176
    %v832 = vlaneseq
    %v833 = vshrl.u32 %v832, 7
    %v834 = vsub.s32 %v831, %v833
    %v835 = vrot.slane %v191, %v834
    %vm836 = vcmask 1048512
    %v837 = vsel %vm836, %v835, %v830
    %v838 = vlaneseq
    %v839 = vshrl.u32 %v838, 7
    %v840 = vsub.s32 %v728, %v839
    %v841 = vrot.slane %v194, %v840
    %v842 = vlaneseq
    %v843 = vshrl.u32 %v842, 7
    %v844 = vsub.s32 %v733, %v843
    %v845 = vrot.slane %v197, %v844
    %v846 = vsel %vm738, %v845, %v841
    %v847 = vlaneseq
    %v848 = vshrl.u32 %v847, 7
    %v849 = vsub.s32 %v740, %v848
    %v850 = vrot.slane %v200, %v849
    %v851 = vsel %vm745, %v850, %v846
    %v852 = vlaneseq
    %v853 = vshrl.u32 %v852, 7
    %v854 = vsub.s32 %v747, %v853
    %v855 = vrot.slane %v203, %v854
    %v856 = vsel %vm752, %v855, %v851
    %v857 = vlaneseq
    %v858 = vshrl.u32 %v857, 7
    %v859 = vsub.s32 %v754, %v858
    %v860 = vrot.slane %v206, %v859
    %v861 = vsel %vm759, %v860, %v856
    %v862 = vlaneseq
    %v863 = vshrl.u32 %v862, 7
    %v864 = vsub.s32 %v761, %v863
    %v865 = vrot.slane %v209, %v864
    %v866 = vsel %vm766, %v865, %v861
    %v867 = vlaneseq
    %v868 = vshrl.u32 %v867, 7
    %v869 = vsub.s32 %v768, %v868
    %v870 = vrot.slane %v212, %v869
    %v871 = vsel %vm773, %v870, %v866
    %v872 = vlaneseq
    %v873 = vshrl.u32 %v872, 7
    %v874 = vsub.s32 %v775, %v873
    %v875 = vrot.slane %v215, %v874
    %v876 = vsel %vm780, %v875, %v871
    %v877 = vlaneseq
    %v878 = vshrl.u32 %v877, 7
    %v879 = vsub.s32 %v782, %v878
    %v880 = vrot.slane %v218, %v879
    %v881 = vsel %vm787, %v880, %v876
    %v882 = vlaneseq
    %v883 = vshrl.u32 %v882, 7
    %v884 = vsub.s32 %v789, %v883
    %v885 = vrot.slane %v221, %v884
    %v886 = vsel %vm794, %v885, %v881
    %v887 = vlaneseq
    %v888 = vshrl.u32 %v887, 7
    %v889 = vsub.s32 %v796, %v888
    %v890 = vrot.slane %v224, %v889
    %v891 = vsel %vm801, %v890, %v886
    %v892 = vlaneseq
    %v893 = vshrl.u32 %v892, 7
    %v894 = vsub.s32 %v803, %v893
    %v895 = vrot.slane %v227, %v894
    %v896 = vsel %vm808, %v895, %v891
    %v897 = vlaneseq
    %v898 = vshrl.u32 %v897, 7
    %v899 = vsub.s32 %v810, %v898
    %v900 = vrot.slane %v230, %v899
    %v901 = vsel %vm815, %v900, %v896
    %v902 = vlaneseq
    %v903 = vshrl.u32 %v902, 7
    %v904 = vsub.s32 %v817, %v903
    %v905 = vrot.slane %v233, %v904
    %v906 = vsel %vm822, %v905, %v901
    %v907 = vlaneseq
    %v908 = vshrl.u32 %v907, 7
    %v909 = vsub.s32 %v824, %v908
    %v910 = vrot.slane %v236, %v909
    %v911 = vsel %vm829, %v910, %v906
    %v912 = vlaneseq
    %v913 = vshrl.u32 %v912, 7
    %v914 = vsub.s32 %v831, %v913
    %v915 = vrot.slane %v239, %v914
    %v916 = vsel %vm836, %v915, %v911
    %v917 = vlaneseq
    %v918 = vshrl.u32 %v917, 7
    %v919 = vsub.s32 %v728, %v918
    %v920 = vrot.slane %v242, %v919
    %v921 = vlaneseq
    %v922 = vshrl.u32 %v921, 7
    %v923 = vsub.s32 %v733, %v922
    %v924 = vrot.slane %v245, %v923
    %v925 = vsel %vm738, %v924, %v920
    %v926 = vlaneseq
    %v927 = vshrl.u32 %v926, 7
    %v928 = vsub.s32 %v740, %v927
    %v929 = vrot.slane %v248, %v928
    %v930 = vsel %vm745, %v929, %v925
    %v931 = vlaneseq
    %v932 = vshrl.u32 %v931, 7
    %v933 = vsub.s32 %v747, %v932
    %v934 = vrot.slane %v251, %v933
    %v935 = vsel %vm752, %v934, %v930
    %v936 = vlaneseq
    %v937 = vshrl.u32 %v936, 7
    %v938 = vsub.s32 %v754, %v937
    %v939 = vrot.slane %v254, %v938
    %v940 = vsel %vm759, %v939, %v935
    %v941 = vlaneseq
    %v942 = vshrl.u32 %v941, 7
    %v943 = vsub.s32 %v761, %v942
    %v944 = vrot.slane %v257, %v943
    %v945 = vsel %vm766, %v944, %v940
    %v946 = vlaneseq
    %v947 = vshrl.u32 %v946, 7
    %v948 = vsub.s32 %v768, %v947
    %v949 = vrot.slane %v260, %v948
    %v950 = vsel %vm773, %v949, %v945
    %v951 = vlaneseq
    %v952 = vshrl.u32 %v951, 7
    %v953 = vsub.s32 %v775, %v952
    %v954 = vrot.slane %v263, %v953
    %v955 = vsel %vm780, %v954, %v950
    %v956 = vlaneseq
    %v957 = vshrl.u32 %v956, 7
    %v958 = vsub.s32 %v782, %v957
    %v959 = vrot.slane %v266, %v958
    %v960 = vsel %vm787, %v959, %v955
    %v961 = vlaneseq
    %v962 = vshrl.u32 %v961, 7
    %v963 = vsub.s32 %v789, %v962
    %v964 = vrot.slane %v269, %v963
    %v965 = vsel %vm794, %v964, %v960
    %v966 = vlaneseq
    %v967 = vshrl.u32 %v966, 7
    %v968 = vsub.s32 %v796, %v967
    %v969 = vrot.slane %v272, %v968
    %v970 = vsel %vm801, %v969, %v965
    %v971 = vlaneseq
    %v972 = vshrl.u32 %v971, 7
    %v973 = vsub.s32 %v803, %v972
    %v974 = vrot.slane %v275, %v973
    %v975 = vsel %vm808, %v974, %v970
    %v976 = vlaneseq
    %v977 = vshrl.u32 %v976, 7
    %v978 = vsub.s32 %v810, %v977
    %v979 = vrot.slane %v278, %v978
    %v980 = vsel %vm815, %v979, %v975
    %v981 = vlaneseq
    %v982 = vshrl.u32 %v981, 7
    %v983 = vsub.s32 %v817, %v982
    %v984 = vrot.slane %v281, %v983
    %v985 = vsel %vm822, %v984, %v980
    %v986 = vlaneseq
    %v987 = vshrl.u32 %v986, 7
    %v988 = vsub.s32 %v824, %v987
    %v989 = vrot.slane %v284, %v988
    %v990 = vsel %vm829, %v989, %v985
    %v991 = vlaneseq
    %v992 = vshrl.u32 %v991, 7
    %v993 = vsub.s32 %v831, %v992
    %v994 = vrot.slane %v287, %v993
    %v995 = vsel %vm836, %v994, %v990
    %v996 = vlaneseq
    %v997 = vshrl.u32 %v996, 7
    %v998 = vsub.s32 %v728, %v997
    %v999 = vrot.slane %v290, %v998
    %v1000 = vlaneseq
    %v1001 = vshrl.u32 %v1000, 7
    %v1002 = vsub.s32 %v733, %v1001
    %v1003 = vrot.slane %v293, %v1002
    %v1004 = vsel %vm738, %v1003, %v999
    %v1005 = vlaneseq
    %v1006 = vshrl.u32 %v1005, 7
    %v1007 = vsub.s32 %v740, %v1006
    %v1008 = vrot.slane %v296, %v1007
    %v1009 = vsel %vm745, %v1008, %v1004
    %v1010 = vlaneseq
    %v1011 = vshrl.u32 %v1010, 7
    %v1012 = vsub.s32 %v747, %v1011
    %v1013 = vrot.slane %v299, %v1012
    %v1014 = vsel %vm752, %v1013, %v1009
    %v1015 = vlaneseq
    %v1016 = vshrl.u32 %v1015, 7
    %v1017 = vsub.s32 %v754, %v1016
    %v1018 = vrot.slane %v302, %v1017
    %v1019 = vsel %vm759, %v1018, %v1014
    %v1020 = vlaneseq
    %v1021 = vshrl.u32 %v1020, 7
    %v1022 = vsub.s32 %v761, %v1021
    %v1023 = vrot.slane %v305, %v1022
    %v1024 = vsel %vm766, %v1023, %v1019
    %v1025 = vlaneseq
    %v1026 = vshrl.u32 %v1025, 7
    %v1027 = vsub.s32 %v768, %v1026
    %v1028 = vrot.slane %v308, %v1027
    %v1029 = vsel %vm773, %v1028, %v1024
    %v1030 = vlaneseq
    %v1031 = vshrl.u32 %v1030, 7
    %v1032 = vsub.s32 %v775, %v1031
    %v1033 = vrot.slane %v311, %v1032
    %v1034 = vsel %vm780, %v1033, %v1029
    %v1035 = vlaneseq
    %v1036 = vshrl.u32 %v1035, 7
    %v1037 = vsub.s32 %v782, %v1036
    %v1038 = vrot.slane %v314, %v1037
    %v1039 = vsel %vm787, %v1038, %v1034
    %v1040 = vlaneseq
    %v1041 = vshrl.u32 %v1040, 7
    %v1042 = vsub.s32 %v789, %v1041
    %v1043 = vrot.slane %v317, %v1042
    %v1044 = vsel %vm794, %v1043, %v1039
    %v1045 = vlaneseq
    %v1046 = vshrl.u32 %v1045, 7
    %v1047 = vsub.s32 %v796, %v1046
    %v1048 = vrot.slane %v320, %v1047
    %v1049 = vsel %vm801, %v1048, %v1044
    %v1050 = vlaneseq
    %v1051 = vshrl.u32 %v1050, 7
    %v1052 = vsub.s32 %v803, %v1051
    %v1053 = vrot.slane %v323, %v1052
    %v1054 = vsel %vm808, %v1053, %v1049
    %v1055 = vlaneseq
    %v1056 = vshrl.u32 %v1055, 7
    %v1057 = vsub.s32 %v810, %v1056
    %v1058 = vrot.slane %v326, %v1057
    %v1059 = vsel %vm815, %v1058, %v1054
    %v1060 = vlaneseq
    %v1061 = vshrl.u32 %v1060, 7
    %v1062 = vsub.s32 %v817, %v1061
    %v1063 = vrot.slane %v329, %v1062
    %v1064 = vsel %vm822, %v1063, %v1059
    %v1065 = vlaneseq
    %v1066 = vshrl.u32 %v1065, 7
    %v1067 = vsub.s32 %v824, %v1066
    %v1068 = vrot.slane %v332, %v1067
    %v1069 = vsel %vm829, %v1068, %v1064
    %v1070 = vlaneseq
    %v1071 = vshrl.u32 %v1070, 7
    %v1072 = vsub.s32 %v831, %v1071
    %v1073 = vrot.slane %v335, %v1072
    %v1074 = vsel %vm836, %v1073, %v1069
    %v1075 = vlaneseq
    %v1076 = vshrl.u32 %v1075, 7
    %v1077 = vsub.s32 %v728, %v1076
    %v1078 = vrot.slane %v338, %v1077
    %v1079 = vlaneseq
    %v1080 = vshrl.u32 %v1079, 7
    %v1081 = vsub.s32 %v733, %v1080
    %v1082 = vrot.slane %v341, %v1081
    %v1083 = vsel %vm738, %v1082, %v1078
    %v1084 = vlaneseq
    %v1085 = vshrl.u32 %v1084, 7
    %v1086 = vsub.s32 %v740, %v1085
    %v1087 = vrot.slane %v344, %v1086
    %v1088 = vsel %vm745, %v1087, %v1083
    %v1089 = vlaneseq
    %v1090 = vshrl.u32 %v1089, 7
    %v1091 = vsub.s32 %v747, %v1090
    %v1092 = vrot.slane %v347, %v1091
    %v1093 = vsel %vm752, %v1092, %v1088
    %v1094 = vlaneseq
    %v1095 = vshrl.u32 %v1094, 7
    %v1096 = vsub.s32 %v754, %v1095
    %v1097 = vrot.slane %v350, %v1096
    %v1098 = vsel %vm759, %v1097, %v1093
    %v1099 = vlaneseq
    %v1100 = vshrl.u32 %v1099, 7
    %v1101 = vsub.s32 %v761, %v1100
    %v1102 = vrot.slane %v353, %v1101
    %v1103 = vsel %vm766, %v1102, %v1098
    %v1104 = vlaneseq
    %v1105 = vshrl.u32 %v1104, 7
    %v1106 = vsub.s32 %v768, %v1105
    %v1107 = vrot.slane %v356, %v1106
    %v1108 = vsel %vm773, %v1107, %v1103
    %v1109 = vlaneseq
    %v1110 = vshrl.u32 %v1109, 7
    %v1111 = vsub.s32 %v775, %v1110
    %v1112 = vrot.slane %v359, %v1111
    %v1113 = vsel %vm780, %v1112, %v1108
    %v1114 = vlaneseq
    %v1115 = vshrl.u32 %v1114, 7
    %v1116 = vsub.s32 %v782, %v1115
    %v1117 = vrot.slane %v362, %v1116
    %v1118 = vsel %vm787, %v1117, %v1113
    %v1119 = vlaneseq
    %v1120 = vshrl.u32 %v1119, 7
    %v1121 = vsub.s32 %v789, %v1120
    %v1122 = vrot.slane %v365, %v1121
    %v1123 = vsel %vm794, %v1122, %v1118
    %v1124 = vlaneseq
    %v1125 = vshrl.u32 %v1124, 7
    %v1126 = vsub.s32 %v796, %v1125
    %v1127 = vrot.slane %v368, %v1126
    %v1128 = vsel %vm801, %v1127, %v1123
    %v1129 = vlaneseq
    %v1130 = vshrl.u32 %v1129, 7
    %v1131 = vsub.s32 %v803, %v1130
    %v1132 = vrot.slane %v371, %v1131
    %v1133 = vsel %vm808, %v1132, %v1128
    %v1134 = vlaneseq
    %v1135 = vshrl.u32 %v1134, 7
    %v1136 = vsub.s32 %v810, %v1135
    %v1137 = vrot.slane %v374, %v1136
    %v1138 = vsel %vm815, %v1137, %v1133
    %v1139 = vlaneseq
    %v1140 = vshrl.u32 %v1139, 7
    %v1141 = vsub.s32 %v817, %v1140
    %v1142 = vrot.slane %v377, %v1141
    %v1143 = vsel %vm822, %v1142, %v1138
    %v1144 = vlaneseq
    %v1145 = vshrl.u32 %v1144, 7
    %v1146 = vsub.s32 %v824, %v1145
    %v1147 = vrot.slane %v380, %v1146
    %v1148 = vsel %vm829, %v1147, %v1143
    %v1149 = vlaneseq
    %v1150 = vshrl.u32 %v1149, 7
    %v1151 = vsub.s32 %v831, %v1150
    %v1152 = vrot.slane %v383, %v1151
    %v1153 = vsel %vm836, %v1152, %v1148
    %v1154 = vlaneseq
    %v1155 = vshrl.u32 %v1154, 7
    %v1156 = vsub.s32 %v728, %v1155
    %v1157 = vrot.slane %v386, %v1156
    %v1158 = vlaneseq
    %v1159 = vshrl.u32 %v1158, 7
    %v1160 = vsub.s32 %v733, %v1159
    %v1161 = vrot.slane %v389, %v1160
    %v1162 = vsel %vm738, %v1161, %v1157
    %v1163 = vlaneseq
    %v1164 = vshrl.u32 %v1163, 7
    %v1165 = vsub.s32 %v740, %v1164
    %v1166 = vrot.slane %v392, %v1165
    %v1167 = vsel %vm745, %v1166, %v1162
    %v1168 = vlaneseq
    %v1169 = vshrl.u32 %v1168, 7
    %v1170 = vsub.s32 %v747, %v1169
    %v1171 = vrot.slane %v395, %v1170
    %v1172 = vsel %vm752, %v1171, %v1167
    %v1173 = vlaneseq
    %v1174 = vshrl.u32 %v1173, 7
    %v1175 = vsub.s32 %v754, %v1174
    %v1176 = vrot.slane %v398, %v1175
    %v1177 = vsel %vm759, %v1176, %v1172
    %v1178 = vlaneseq
    %v1179 = vshrl.u32 %v1178, 7
    %v1180 = vsub.s32 %v761, %v1179
    %v1181 = vrot.slane %v401, %v1180
    %v1182 = vsel %vm766, %v1181, %v1177
    %v1183 = vlaneseq
    %v1184 = vshrl.u32 %v1183, 7
    %v1185 = vsub.s32 %v768, %v1184
    %v1186 = vrot.slane %v404, %v1185
    %v1187 = vsel %vm773, %v1186, %v1182
    %v1188 = vlaneseq
    %v1189 = vshrl.u32 %v1188, 7
    %v1190 = vsub.s32 %v775, %v1189
    %v1191 = vrot.slane %v407, %v1190
    %v1192 = vsel %vm780, %v1191, %v1187
    %v1193 = vlaneseq
    %v1194 = vshrl.u32 %v1193, 7
    %v1195 = vsub.s32 %v782, %v1194
    %v1196 = vrot.slane %v410, %v1195
    %v1197 = vsel %vm787, %v1196, %v1192
    %v1198 = vlaneseq
    %v1199 = vshrl.u32 %v1198, 7
    %v1200 = vsub.s32 %v789, %v1199
    %v1201 = vrot.slane %v413, %v1200
    %v1202 = vsel %vm794, %v1201, %v1197
    %v1203 = vlaneseq
    %v1204 = vshrl.u32 %v1203, 7
    %v1205 = vsub.s32 %v796, %v1204
    %v1206 = vrot.slane %v416, %v1205
    %v1207 = vsel %vm801, %v1206, %v1202
    %v1208 = vlaneseq
    %v1209 = vshrl.u32 %v1208, 7
    %v1210 = vsub.s32 %v803, %v1209
    %v1211 = vrot.slane %v419, %v1210
    %v1212 = vsel %vm808, %v1211, %v1207
    %v1213 = vlaneseq
    %v1214 = vshrl.u32 %v1213, 7
    %v1215 = vsub.s32 %v810, %v1214
    %v1216 = vrot.slane %v422, %v1215
    %v1217 = vsel %vm815, %v1216, %v1212
    %v1218 = vlaneseq
    %v1219 = vshrl.u32 %v1218, 7
    %v1220 = vsub.s32 %v817, %v1219
    %v1221 = vrot.slane %v425, %v1220
    %v1222 = vsel %vm822, %v1221, %v1217
    %v1223 = vlaneseq
    %v1224 = vshrl.u32 %v1223, 7
    %v1225 = vsub.s32 %v824, %v1224
    %v1226 = vrot.slane %v428, %v1225
    %v1227 = vsel %vm829, %v1226, %v1222
    %v1228 = vlaneseq
    %v1229 = vshrl.u32 %v1228, 7
    %v1230 = vsub.s32 %v831, %v1229
    %v1231 = vrot.slane %v431, %v1230
    %v1232 = vsel %vm836, %v1231, %v1227
    %v1233 = vlaneseq
    %v1234 = vshrl.u32 %v1233, 7
    %v1235 = vsub.s32 %v728, %v1234
    %v1236 = vrot.slane %v434, %v1235
    %v1237 = vlaneseq
    %v1238 = vshrl.u32 %v1237, 7
    %v1239 = vsub.s32 %v733, %v1238
    %v1240 = vrot.slane %v437, %v1239
    %v1241 = vsel %vm738, %v1240, %v1236
    %v1242 = vlaneseq
    %v1243 = vshrl.u32 %v1242, 7
    %v1244 = vsub.s32 %v740, %v1243
    %v1245 = vrot.slane %v440, %v1244
    %v1246 = vsel %vm745, %v1245, %v1241
    %v1247 = vlaneseq
    %v1248 = vshrl.u32 %v1247, 7
    %v1249 = vsub.s32 %v747, %v1248
    %v1250 = vrot.slane %v443, %v1249
    %v1251 = vsel %vm752, %v1250, %v1246
    %v1252 = vlaneseq
    %v1253 = vshrl.u32 %v1252, 7
    %v1254 = vsub.s32 %v754, %v1253
    %v1255 = vrot.slane %v446, %v1254
    %v1256 = vsel %vm759, %v1255, %v1251
    %v1257 = vlaneseq
    %v1258 = vshrl.u32 %v1257, 7
    %v1259 = vsub.s32 %v761, %v1258
    %v1260 = vrot.slane %v449, %v1259
    %v1261 = vsel %vm766, %v1260, %v1256
    %v1262 = vlaneseq
    %v1263 = vshrl.u32 %v1262, 7
    %v1264 = vsub.s32 %v768, %v1263
    %v1265 = vrot.slane %v452, %v1264
    %v1266 = vsel %vm773, %v1265, %v1261
    %v1267 = vlaneseq
    %v1268 = vshrl.u32 %v1267, 7
    %v1269 = vsub.s32 %v775, %v1268
    %v1270 = vrot.slane %v455, %v1269
    %v1271 = vsel %vm780, %v1270, %v1266
    %v1272 = vlaneseq
    %v1273 = vshrl.u32 %v1272, 7
    %v1274 = vsub.s32 %v782, %v1273
    %v1275 = vrot.slane %v458, %v1274
    %v1276 = vsel %vm787, %v1275, %v1271
    %v1277 = vlaneseq
    %v1278 = vshrl.u32 %v1277, 7
    %v1279 = vsub.s32 %v789, %v1278
    %v1280 = vrot.slane %v461, %v1279
    %v1281 = vsel %vm794, %v1280, %v1276
    %v1282 = vlaneseq
    %v1283 = vshrl.u32 %v1282, 7
    %v1284 = vsub.s32 %v796, %v1283
    %v1285 = vrot.slane %v464, %v1284
    %v1286 = vsel %vm801, %v1285, %v1281
    %v1287 = vlaneseq
    %v1288 = vshrl.u32 %v1287, 7
    %v1289 = vsub.s32 %v803, %v1288
    %v1290 = vrot.slane %v467, %v1289
    %v1291 = vsel %vm808, %v1290, %v1286
    %v1292 = vlaneseq
    %v1293 = vshrl.u32 %v1292, 7
    %v1294 = vsub.s32 %v810, %v1293
    %v1295 = vrot.slane %v470, %v1294
    %v1296 = vsel %vm815, %v1295, %v1291
    %v1297 = vlaneseq
    %v1298 = vshrl.u32 %v1297, 7
    %v1299 = vsub.s32 %v817, %v1298
    %v1300 = vrot.slane %v473, %v1299
    %v1301 = vsel %vm822, %v1300, %v1296
    %v1302 = vlaneseq
    %v1303 = vshrl.u32 %v1302, 7
    %v1304 = vsub.s32 %v824, %v1303
    %v1305 = vrot.slane %v476, %v1304
    %v1306 = vsel %vm829, %v1305, %v1301
    %v1307 = vlaneseq
    %v1308 = vshrl.u32 %v1307, 7
    %v1309 = vsub.s32 %v831, %v1308
    %v1310 = vrot.slane %v479, %v1309
    %v1311 = vsel %vm836, %v1310, %v1306
    %v1312 = vlaneseq
    %v1313 = vshrl.u32 %v1312, 7
    %v1314 = vsub.s32 %v728, %v1313
    %v1315 = vrot.slane %v482, %v1314
    %v1316 = vlaneseq
    %v1317 = vshrl.u32 %v1316, 7
    %v1318 = vsub.s32 %v733, %v1317
    %v1319 = vrot.slane %v485, %v1318
    %v1320 = vsel %vm738, %v1319, %v1315
    %v1321 = vlaneseq
    %v1322 = vshrl.u32 %v1321, 7
    %v1323 = vsub.s32 %v740, %v1322
    %v1324 = vrot.slane %v488, %v1323
    %v1325 = vsel %vm745, %v1324, %v1320
    %v1326 = vlaneseq
    %v1327 = vshrl.u32 %v1326, 7
    %v1328 = vsub.s32 %v747, %v1327
    %v1329 = vrot.slane %v491, %v1328
    %v1330 = vsel %vm752, %v1329, %v1325
    %v1331 = vlaneseq
    %v1332 = vshrl.u32 %v1331, 7
    %v1333 = vsub.s32 %v754, %v1332
    %v1334 = vrot.slane %v494, %v1333
    %v1335 = vsel %vm759, %v1334, %v1330
    %v1336 = vlaneseq
    %v1337 = vshrl.u32 %v1336, 7
    %v1338 = vsub.s32 %v761, %v1337
    %v1339 = vrot.slane %v497, %v1338
    %v1340 = vsel %vm766, %v1339, %v1335
    %v1341 = vlaneseq
    %v1342 = vshrl.u32 %v1341, 7
    %v1343 = vsub.s32 %v768, %v1342
    %v1344 = vrot.slane %v500, %v1343
    %v1345 = vsel %vm773, %v1344, %v1340
    %v1346 = vlaneseq
    %v1347 = vshrl.u32 %v1346, 7
    %v1348 = vsub.s32 %v775, %v1347
    %v1349 = vrot.slane %v503, %v1348
    %v1350 = vsel %vm780, %v1349, %v1345
    %v1351 = vlaneseq
    %v1352 = vshrl.u32 %v1351, 7
    %v1353 = vsub.s32 %v782, %v1352
    %v1354 = vrot.slane %v506, %v1353
    %v1355 = vsel %vm787, %v1354, %v1350
    %v1356 = vlaneseq
    %v1357 = vshrl.u32 %v1356, 7
    %v1358 = vsub.s32 %v789, %v1357
    %v1359 = vrot.slane %v509, %v1358
    %v1360 = vsel %vm794, %v1359, %v1355
    %v1361 = vlaneseq
    %v1362 = vshrl.u32 %v1361, 7
    %v1363 = vsub.s32 %v796, %v1362
    %v1364 = vrot.slane %v512, %v1363
    %v1365 = vsel %vm801, %v1364, %v1360
    %v1366 = vlaneseq
    %v1367 = vshrl.u32 %v1366, 7
    %v1368 = vsub.s32 %v803, %v1367
    %v1369 = vrot.slane %v515, %v1368
    %v1370 = vsel %vm808, %v1369, %v1365
    %v1371 = vlaneseq
    %v1372 = vshrl.u32 %v1371, 7
    %v1373 = vsub.s32 %v810, %v1372
    %v1374 = vrot.slane %v518, %v1373
    %v1375 = vsel %vm815, %v1374, %v1370
    %v1376 = vlaneseq
    %v1377 = vshrl.u32 %v1376, 7
    %v1378 = vsub.s32 %v817, %v1377
    %v1379 = vrot.slane %v521, %v1378
    %v1380 = vsel %vm822, %v1379, %v1375
    %v1381 = vlaneseq
    %v1382 = vshrl.u32 %v1381, 7
    %v1383 = vsub.s32 %v824, %v1382
    %v1384 = vrot.slane %v524, %v1383
    %v1385 = vsel %vm829, %v1384, %v1380
    %v1386 = vlaneseq
    %v1387 = vshrl.u32 %v1386, 7
    %v1388 = vsub.s32 %v831, %v1387
    %v1389 = vrot.slane %v527, %v1388
    %v1390 = vsel %vm836, %v1389, %v1385
    %vm1391 = vcmask 1041409
    %v1392 = vsel %vm1391, %v1153, %v837
    %v1393 = vsel %vm1391, %v1232, %v916
    %v1394 = vsel %vm1391, %v1311, %v995
    %v1395 = vsel %vm1391, %v1390, %v1074
    %1400 = vmatprep.subr.mxu0 0.0
    %1401 = vmatpush1.msra.mxu0 %v528
    %1402 = vmatprep.subr.mxu0 0.0
    %1403 = vmatpush1.msra.mxu0 %v529
    %1404 = vmatprep.subr.mxu0 0.0
    %1405 = vmatpush1.msra.mxu0 %v530
    %1406 = vmatprep.subr.mxu0 0.0
    %1407 = vmatpush1.msra.mxu0 %v531
    %1408 = vmatprep.subr.mxu0 0.0
    %1409 = vmatpush1.msra.mxu0 %v532
    %1410 = vmatprep.subr.mxu0 0.0
    %1411 = vmatpush1.msra.mxu0 %v533
    %1412 = vmatprep.subr.mxu0 0.0
    %1413 = vmatpush1.msra.mxu0 %v534
    %1414 = vmatprep.subr.mxu0 0.0
    %1415 = vmatpush1.msra.mxu0 %v535
    %1416 = vmatprep.subr.mxu0 0.0
    %1417 = vmatpush1.msra.mxu0 %v536
    %1418 = vmatprep.subr.mxu0 0.0
    %1419 = vmatpush1.msra.mxu0 %v537
    %1420 = vmatprep.subr.mxu0 0.0
    %1421 = vmatpush1.msra.mxu0 %v538
    %1422 = vmatprep.subr.mxu0 0.0
    %1423 = vmatpush1.msra.mxu0 %v539
    %1424 = vmatprep.subr.mxu0 0.0
    %1425 = vmatpush1.msra.mxu0 %v540
    %1426 = vmatprep.subr.mxu0 0.0
    %1427 = vmatpush1.msra.mxu0 %v541
    %1428 = vmatprep.subr.mxu0 0.0
    %1429 = vmatpush1.msra.mxu0 %v542
    %1430 = vmatprep.subr.mxu0 0.0
    %1431 = vmatpush1.msra.mxu0 %v543
    %1432 = vmatprep.subr.mxu0 0.0
    %1433 = vmatpush1.msra.mxu0 %v544
    %1434 = vmatprep.subr.mxu0 0.0
    %1435 = vmatpush1.msra.mxu0 %v545
    %1436 = vmatprep.subr.mxu0 0.0
    %1437 = vmatpush1.msra.mxu0 %v546
    %1438 = vmatprep.subr.mxu0 0.0
    %1439 = vmatpush1.msra.mxu0 %v547
    %1440 = vmatprep.subr.mxu0 0.0
    %1441 = vmatpush1.msra.mxu0 %v548
    %1442 = vmatprep.subr.mxu0 0.0
    %1443 = vmatpush1.msra.mxu0 %v549
    %1444 = vmatprep.subr.mxu0 0.0
    %1445 = vmatpush1.msra.mxu0 %v550
    %1446 = vmatprep.subr.mxu0 0.0
    %1447 = vmatpush1.msra.mxu0 %v551
    %1448 = vmatprep.subr.mxu0 0.0
    %1449 = vmatpush1.msra.mxu0 %v552
    %1450 = vmatprep.subr.mxu0 0.0
    %1451 = vmatpush1.msra.mxu0 %v553
    %1452 = vmatprep.subr.mxu0 0.0
    %1453 = vmatpush1.msra.mxu0 %v554
    %1454 = vmatprep.subr.mxu0 0.0
    %1455 = vmatpush1.msra.mxu0 %v555
    %1456 = vmatprep.subr.mxu0 0.0
    %1457 = vmatpush1.msra.mxu0 %v556
    %1458 = vmatprep.subr.mxu0 0.0
    %1459 = vmatpush1.msra.mxu0 %v557
    %1460 = vmatprep.subr.mxu0 0.0
    %1461 = vmatpush1.msra.mxu0 %v558
    %1462 = vmatprep.subr.mxu0 0.0
    %1463 = vmatpush1.msra.mxu0 %v559
    %1464 = vmatprep.mubr.f32.mxu0 %v1393
    %1465 = vmatmul.mubr.f32.gmra.mrb[0].mxu0 %v1392
    %v1466 = vpop.f32.mrb[0].mxu0
    %v1467 = vadd.f32 %v597, %v1466
    %v1468 = vpop.f32.mrb[0].mxu0
    %1469 = vdwg.mxu0
    %1470 = vmatprep.subr.mxu0 0.0
    %1471 = vmatpush1.msra.mxu0 %v560
    %1472 = vmatprep.subr.mxu0 0.0
    %1473 = vmatpush1.msra.mxu0 %v561
    %1474 = vmatprep.subr.mxu0 0.0
    %1475 = vmatpush1.msra.mxu0 %v562
    %1476 = vmatprep.subr.mxu0 0.0
    %1477 = vmatpush1.msra.mxu0 %v563
    %1478 = vmatprep.subr.mxu0 0.0
    %1479 = vmatpush1.msra.mxu0 %v564
    %1480 = vmatprep.subr.mxu0 0.0
    %1481 = vmatpush1.msra.mxu0 %v565
    %1482 = vmatprep.subr.mxu0 0.0
    %1483 = vmatpush1.msra.mxu0 %v566
    %1484 = vmatprep.subr.mxu0 0.0
    %1485 = vmatpush1.msra.mxu0 %v567
    %1486 = vmatprep.subr.mxu0 0.0
    %1487 = vmatpush1.msra.mxu0 %v568
    %1488 = vmatprep.subr.mxu0 0.0
    %1489 = vmatpush1.msra.mxu0 %v569
    %1490 = vmatprep.subr.mxu0 0.0
    %1491 = vmatpush1.msra.mxu0 %v570
    %1492 = vmatprep.subr.mxu0 0.0
    %1493 = vmatpush1.msra.mxu0 %v571
    %1494 = vmatprep.subr.mxu0 0.0
    %1495 = vmatpush1.msra.mxu0 %v572
    %1496 = vmatprep.subr.mxu0 0.0
    %1497 = vmatpush1.msra.mxu0 %v573
    %1498 = vmatprep.subr.mxu0 0.0
    %1499 = vmatpush1.msra.mxu0 %v574
    %1500 = vmatprep.subr.mxu0 0.0
    %1501 = vmatpush1.msra.mxu0 %v575
    %1502 = vmatprep.subr.mxu0 0.0
    %1503 = vmatpush1.msra.mxu0 %v576
    %1504 = vmatprep.subr.mxu0 0.0
    %1505 = vmatpush1.msra.mxu0 %v577
    %1506 = vmatprep.subr.mxu0 0.0
    %1507 = vmatpush1.msra.mxu0 %v578
    %1508 = vmatprep.subr.mxu0 0.0
    %1509 = vmatpush1.msra.mxu0 %v579
    %1510 = vmatprep.subr.mxu0 0.0
    %1511 = vmatpush1.msra.mxu0 %v580
    %1512 = vmatprep.subr.mxu0 0.0
    %1513 = vmatpush1.msra.mxu0 %v581
    %1514 = vmatprep.subr.mxu0 0.0
    %1515 = vmatpush1.msra.mxu0 %v582
    %1516 = vmatprep.subr.mxu0 0.0
    %1517 = vmatpush1.msra.mxu0 %v583
    %1518 = vmatprep.subr.mxu0 0.0
    %1519 = vmatpush1.msra.mxu0 %v584
    %1520 = vmatprep.subr.mxu0 0.0
    %1521 = vmatpush1.msra.mxu0 %v585
    %1522 = vmatprep.subr.mxu0 0.0
    %1523 = vmatpush1.msra.mxu0 %v586
    %1524 = vmatprep.subr.mxu0 0.0
    %1525 = vmatpush1.msra.mxu0 %v587
    %1526 = vmatprep.subr.mxu0 0.0
    %1527 = vmatpush1.msra.mxu0 %v588
    %1528 = vmatprep.subr.mxu0 0.0
    %1529 = vmatpush1.msra.mxu0 %v589
    %1530 = vmatprep.subr.mxu0 0.0
    %1531 = vmatpush1.msra.mxu0 %v590
    %1532 = vmatprep.subr.mxu0 0.0
    %1533 = vmatpush1.msra.mxu0 %v591
    %1534 = vmatprep.mubr.f32.mxu0 %v1395
    %1535 = vmatmul.mubr.f32.gmra.mrb[0].mxu0 %v1394
    %v1536 = vpop.f32.mrb[0].mxu0
    %v1537 = vadd.f32 %v1467, %v1536
    %v1538 = vpop.f32.mrb[0].mxu0
    %1539 = vdwg.mxu0
    %1540 = vst [vmem:[#allocation2] sm:$0x3] %v1537
    // Predicated region
    $region14: #{tpu_custom_call.1} parent=1 // pred_check
      _
    $region15: #{tpu_custom_call.1} parent=1 // pred_check_branch
      %1542 = sbr.rel (0) target = $region17
    $region16: #{tpu_custom_call.1} parent=1 // pred_region
      %s1544 = ssub.s32 32, 32
      %1545 = vsyncadd [#allocation3], %s1544
      %s1547 = sshll.u32 [#allocation2], 4
      %s1548 = int_to_ptr.vmem [resolvable:$true] %s1547
      %1550 = dma.vmem_to_hbm [thread:$0]  %s1548, 32, %s3, [#allocation3]
    $region17: #{tpu_custom_call.1} parent=1 // pred_fallthru
      _
    // Predicated region
    $region18: #{tpu_custom_call.1} parent=1 // pred_check
      _
    $region19: #{tpu_custom_call.1} parent=1 // pred_check_branch
      %1552 = sbr.rel (0) target = $region21
    $region20: #{tpu_custom_call.1} parent=1 // pred_region
      %1553 = dma.done [#allocation3], 32
    $region21: #{tpu_custom_call.1} parent=1 // pred_fallthru
      _
    %1554 = vsyncpa [#allocation3], 1

</llo_original>
